<compile_context>
chip_gen: v7x
topology: tpu7x:2x2x1
jax: 0.10.0
libtpu: 0.0.40
codegen_flags: <defaults>
</compile_context>

<pallas_src>
import math

import jax
import jax.numpy as jnp
from jax.experimental import pallas as pl
from jax.experimental.pallas import tpu as pltpu

LABEL_EMB = 2
EPOCH_EMB = 5
NUM_FC = 20
NUM_EPOCH_ROWS = 100
ONEHOT_WIDTH = 128          # sublane-aligned K: 100 epoch rows + 28 zero pad


def mentornet_kernel(x_ref, fused_ep_ref, lab_base_ref, lab_delta_ref,
                     w_lstm_ref, b_lstm_ref, w1_lstm_ref, b1_ref, w2_ref,
                     b2_ref, out_ref):
    x = x_ref[...]                                    # (4, TB) f32, batch on lanes
    tb = x.shape[1]

    losses = x[0:1, :]                                # (1, TB)
    loss_diffs = x[1:2, :]                            # (1, TB)

    # ---- bidirectional LSTM, seq len == 1, zero init state ----
    # h = sigmoid(o) * tanh(sigmoid(i) * tanh(g)); K=2 contraction as VPU FMAs.
    w_lstm = w_lstm_ref[...]                          # (8, 2) rows: fwd i,f,g,o / bwd i,f,g,o
    gates = (w_lstm[:, 0:1] * losses
             + w_lstm[:, 1:2] * loss_diffs
             + b_lstm_ref[...])                       # (8, TB)
    sig = jax.nn.sigmoid(gates)                       # one EUP pass over (8, TB)
    th = jnp.tanh(gates)                              # one EUP pass over (8, TB)
    h_f = sig[3:4, :] * jnp.tanh(sig[0:1, :] * th[2:3, :])   # (1, TB)
    h_b = sig[7:8, :] * jnp.tanh(sig[4:5, :] * th[6:7, :])   # (1, TB)

    # ---- label embedding folded into fc_1: lerp between the two rows ----
    lab = jnp.clip(jnp.trunc(x[2:3, :]), 0.0, 1.0)    # (1, TB), trunc like .long()
    emb_lab = lab_base_ref[...] + lab * lab_delta_ref[...]   # (20, TB)

    # ---- epoch embedding folded into fc_1: one K=128 MXU matmul, N = TB ----
    ep_idx = x[3:4, :].astype(jnp.int32)              # (1, TB), trunc like .long()
    iota = jax.lax.broadcasted_iota(jnp.int32, (ONEHOT_WIDTH, tb), 0)
    onehot = (iota == ep_idx).astype(jnp.float32)     # (128, TB)
    emb_ep = jnp.dot(fused_ep_ref[...], onehot,
                     preferred_element_type=jnp.float32)      # (20, TB)

    # ---- fc_1 (lstm part) as VPU broadcast FMAs, then tanh ----
    w1_lstm = w1_lstm_ref[...]                        # (20, 2)
    h1 = jnp.tanh(emb_ep + emb_lab
                  + h_f * w1_lstm[:, 0:1]
                  + h_b * w1_lstm[:, 1:2]
                  + b1_ref[...])                      # (20, TB)

    # ---- fc_2 (K=20, N=1) as VPU mul + sublane reduce -> lane-dense (1, TB) ----
    out_ref[...] = (jnp.sum(h1 * w2_ref[...], axis=0, keepdims=True)
                    + b2_ref[...])


def _round_up(a, m):
    return (a + m - 1) // m * m


def mentornet_forward(x, kparams, block_b=4096):
    B = x.shape[0]
    tb_req = _round_up(max(block_b, 128), 128)        # lane dim must be /128
    # Keep >= 2 grid steps when the batch allows, so v7x can shard the
    # "parallel" batch axis across its two TensorCores.
    half = _round_up((B + 1) // 2, 128)
    TB = max(128, min(tb_req, half))
    Bp = _round_up(B, TB)

    # Batch on lanes: pad then transpose to (4, Bp).
    x_t = jnp.pad(x, ((0, Bp - B), (0, 0))).T         # (4, Bp)

    weights = (kparams["fused_epoch_w1_t"], kparams["lab_base"],
               kparams["lab_delta"], kparams["w_lstm"], kparams["b_lstm"],
               kparams["w1_lstm"], kparams["b1"], kparams["w2"], kparams["b2"])

    def full_spec(arr):
        # Full-shape block with a constant index_map: stays VMEM-resident
        # across all grid steps.
        nd = arr.ndim
        return pl.BlockSpec(arr.shape, lambda i, _n=nd: (0,) * _n)

    out = pl.pallas_call(
        mentornet_kernel,
        out_shape=jax.ShapeDtypeStruct((1, Bp), jnp.float32),   # lane-dense
        grid=(Bp // TB,),
        in_specs=[pl.BlockSpec((4, TB), lambda i: (0, i))]
                 + [full_spec(w) for w in weights],
        out_specs=pl.BlockSpec((1, TB), lambda i: (0, i)),
        compiler_params=pltpu.CompilerParams(
            dimension_semantics=("parallel",)),
    )(x_t, *weights)
    return out.reshape(Bp, 1)[:B]


def init_params(key):
    """Deterministic raw parameter init mirroring the PyTorch __init__ shapes."""
    ks = jax.random.split(key, 8)

    def xavier(k, shape):
        limit = math.sqrt(6.0 / (shape[0] + shape[1]))
        return jax.random.uniform(k, shape, jnp.float32, -limit, limit)

    label_emb = xavier(ks[0], (2, LABEL_EMB))                    # (2, 2)
    epoch_emb = xavier(ks[1], (NUM_EPOCH_ROWS, EPOCH_EMB))       # (100, 5)

    # LSTM(input=2, hidden=1, bidirectional): weight_ih per dir is (4, 2),
    # biases per dir are (4,) + (4,).  Default init U(-1/sqrt(H), 1/sqrt(H)).
    w_ih_f = jax.random.uniform(ks[2], (4, 2), jnp.float32, -1.0, 1.0)
    w_ih_b = jax.random.uniform(ks[3], (4, 2), jnp.float32, -1.0, 1.0)
    b_f = jax.random.uniform(ks[4], (2, 4), jnp.float32, -1.0, 1.0)  # b_ih, b_hh fwd
    b_b = jax.random.uniform(ks[5], (2, 4), jnp.float32, -1.0, 1.0)  # b_ih, b_hh bwd
    w_lstm_t = jnp.concatenate([w_ih_f, w_ih_b], axis=0).T          # (2, 8)
    b_lstm = jnp.concatenate([b_f.sum(0), b_b.sum(0)])[None, :]     # (1, 8)

    def linear(k, fan_in, fan_out):
        k1, k2 = jax.random.split(k)
        bound = 1.0 / math.sqrt(fan_in)
        w = jax.random.uniform(k1, (fan_out, fan_in), jnp.float32, -bound, bound)
        b = jax.random.uniform(k2, (fan_out,), jnp.float32, -bound, bound)
        return w, b

    feat_dim = LABEL_EMB + EPOCH_EMB + 2                         # 9
    w1, b1 = linear(ks[6], feat_dim, NUM_FC)                     # (20, 9), (20,)
    w2, b2 = linear(ks[7], NUM_FC, 1)                            # (1, 20), (1,)

    return {
        "label_emb": label_emb,
        "epoch_emb": epoch_emb,
        "w_lstm_t": w_lstm_t,
        "b_lstm": b_lstm,
        "w1_t": w1.T, "b1": b1[None, :],
        "w2_t": w2.T, "b2": b2[None, :],
    }


def fuse_params(p):
    """Fold both embedding tables into fc_1 (exact algebra), batch-on-lanes layout."""
    w1_t = p["w1_t"]                                             # (9, 20)
    lab_rows = p["label_emb"] @ w1_t[0:LABEL_EMB]                # (2, 20)
    ep_rows = p["epoch_emb"] @ w1_t[LABEL_EMB:LABEL_EMB + EPOCH_EMB]   # (100, 20)
    fused_ep = jnp.zeros((NUM_FC, ONEHOT_WIDTH), jnp.float32)
    fused_ep = fused_ep.at[:, :NUM_EPOCH_ROWS].set(ep_rows.T)    # (20, 128)
    return {
        "fused_epoch_w1_t": fused_ep,                            # (20, 128)
        "lab_base": lab_rows[0][:, None],                        # (20, 1)
        "lab_delta": (lab_rows[1] - lab_rows[0])[:, None],       # (20, 1)
        "w_lstm": p["w_lstm_t"].T,                               # (8, 2)
        "b_lstm": p["b_lstm"].T,                                 # (8, 1)
        "w1_lstm": w1_t[LABEL_EMB + EPOCH_EMB:].T,               # (20, 2)
        "b1": p["b1"].T,                                         # (20, 1)
        "w2": p["w2_t"],                                         # (20, 1)
        "b2": p["b2"],                                           # (1, 1)
    }


def mentornet_ref(x, p):
    """Pure-JAX reference (raw, unfused params) for correctness checking."""
    losses, loss_diffs = x[:, 0:1], x[:, 1:2]
    labels = x[:, 2].astype(jnp.int32)
    epochs = x[:, 3].astype(jnp.int32)
    lstm_in = jnp.concatenate([losses, loss_diffs], axis=1)
    gates = lstm_in @ p["w_lstm_t"] + p["b_lstm"]
    h_f = jax.nn.sigmoid(gates[:, 3:4]) * jnp.tanh(
        jax.nn.sigmoid(gates[:, 0:1]) * jnp.tanh(gates[:, 2:3]))
    h_b = jax.nn.sigmoid(gates[:, 7:8]) * jnp.tanh(
        jax.nn.sigmoid(gates[:, 4:5]) * jnp.tanh(gates[:, 6:7]))
    feat = jnp.concatenate(
        [p["label_emb"][labels], p["epoch_emb"][epochs], h_f, h_b], axis=1)
    h1 = jnp.tanh(feat @ p["w1_t"] + p["b1"])
    return h1 @ p["w2_t"] + p["b2"]


if __name__ == "__main__":
    key = jax.random.PRNGKey(0)
    kp, kx = jax.random.split(key)

    raw_params = init_params(kp)
    kparams = fuse_params(raw_params)

    # B=8 exercises the single-step small-batch path; B=300 exercises padding,
    # the >=2-step grid and the lane-dense output reshape.
    for B in (8, 300):
        k1, k2, k3, k4, kx = jax.random.split(kx, 5)
        losses = jax.random.normal(k1, (B,), jnp.float32)
        loss_diffs = jax.random.normal(k2, (B,), jnp.float32)
        labels = jax.random.randint(k3, (B,), 0, 2).astype(jnp.float32)
        epochs = jax.random.randint(k4, (B,), 0, NUM_EPOCH_ROWS).astype(jnp.float32)
        x = jnp.stack([losses, loss_diffs, labels, epochs], axis=1)   # (B, 4)

        out = jax.block_until_ready(mentornet_forward(x, kparams))
        ref = mentornet_ref(x, raw_params)
        assert out.shape == (B, 1)
        assert jnp.allclose(out, ref, atol=1e-5, rtol=1e-5), (B, out, ref)

    print("KERNEL_OK")
</pallas_src>

<mosaic_0001>
module attributes {stable_mosaic.version = 11 : i64} {
  func.func @mentornet_kernel(%arg0: i32, %arg1: memref<4x128xf32, #tpu.memory_space<vmem>>, %arg2: memref<20x128xf32, #tpu.memory_space<vmem>>, %arg3: memref<20x1xf32, #tpu.memory_space<vmem>>, %arg4: memref<20x1xf32, #tpu.memory_space<vmem>>, %arg5: memref<8x2xf32, #tpu.memory_space<vmem>>, %arg6: memref<8x1xf32, #tpu.memory_space<vmem>>, %arg7: memref<20x2xf32, #tpu.memory_space<vmem>>, %arg8: memref<20x1xf32, #tpu.memory_space<vmem>>, %arg9: memref<20x1xf32, #tpu.memory_space<vmem>>, %arg10: memref<1x1xf32, #tpu.memory_space<vmem>>, %arg11: memref<1x128xf32, #tpu.memory_space<vmem>>) attributes {dimension_semantics = [#tpu.dimension_semantics<parallel>], iteration_bounds = array<i64: 1>, scalar_prefetch = 0 : i64, scratch_operands = 0 : i64, tpu.core_type = #tpu.core_type<tc>, window_params = [{transform_indices = @transform_0, window_bounds = array<i64: 4, 128>}, {pipeline_mode = #tpu.pipeline_mode<synchronous>, transform_indices = @transform_1, window_bounds = array<i64: 20, 128>}, {pipeline_mode = #tpu.pipeline_mode<synchronous>, transform_indices = @transform_2, window_bounds = array<i64: 20, 1>}, {pipeline_mode = #tpu.pipeline_mode<synchronous>, transform_indices = @transform_3, window_bounds = array<i64: 20, 1>}, {pipeline_mode = #tpu.pipeline_mode<synchronous>, transform_indices = @transform_4, window_bounds = array<i64: 8, 2>}, {pipeline_mode = #tpu.pipeline_mode<synchronous>, transform_indices = @transform_5, window_bounds = array<i64: 8, 1>}, {pipeline_mode = #tpu.pipeline_mode<synchronous>, transform_indices = @transform_6, window_bounds = array<i64: 20, 2>}, {pipeline_mode = #tpu.pipeline_mode<synchronous>, transform_indices = @transform_7, window_bounds = array<i64: 20, 1>}, {pipeline_mode = #tpu.pipeline_mode<synchronous>, transform_indices = @transform_8, window_bounds = array<i64: 20, 1>}, {pipeline_mode = #tpu.pipeline_mode<synchronous>, transform_indices = @transform_9, window_bounds = array<i64: 1, 1>}, {transform_indices = @transform_10, window_bounds = array<i64: 1, 128>}]} {
    %c0 = arith.constant 0 : index
    %c0_0 = arith.constant 0 : index
    %0 = vector.load %arg1[%c0, %c0_0] : memref<4x128xf32, #tpu.memory_space<vmem>>, vector<4x128xf32>
    %1 = vector.extract_strided_slice %0 {offsets = [0, 0], sizes = [1, 128], strides = [1, 1]} : vector<4x128xf32> to vector<1x128xf32>
    %2 = vector.extract_strided_slice %0 {offsets = [1, 0], sizes = [1, 128], strides = [1, 1]} : vector<4x128xf32> to vector<1x128xf32>
    %c0_1 = arith.constant 0 : index
    %c0_2 = arith.constant 0 : index
    %3 = vector.load %arg5[%c0_1, %c0_2] : memref<8x2xf32, #tpu.memory_space<vmem>>, vector<8x2xf32>
    %4 = vector.extract_strided_slice %3 {offsets = [0, 0], sizes = [8, 1], strides = [1, 1]} : vector<8x2xf32> to vector<8x1xf32>
    %5 = vector.broadcast %4 : vector<8x1xf32> to vector<8x128xf32>
    %6 = vector.broadcast %1 : vector<1x128xf32> to vector<8x128xf32>
    %7 = arith.mulf %5, %6 : vector<8x128xf32>
    %8 = vector.extract_strided_slice %3 {offsets = [0, 1], sizes = [8, 1], strides = [1, 1]} : vector<8x2xf32> to vector<8x1xf32>
    %9 = vector.broadcast %8 : vector<8x1xf32> to vector<8x128xf32>
    %10 = vector.broadcast %2 : vector<1x128xf32> to vector<8x128xf32>
    %11 = arith.mulf %9, %10 : vector<8x128xf32>
    %12 = arith.addf %7, %11 : vector<8x128xf32>
    %c0_3 = arith.constant 0 : index
    %c0_4 = arith.constant 0 : index
    %13 = vector.load %arg6[%c0_3, %c0_4] : memref<8x1xf32, #tpu.memory_space<vmem>>, vector<8x1xf32>
    %14 = vector.broadcast %13 : vector<8x1xf32> to vector<8x128xf32>
    %15 = arith.addf %12, %14 : vector<8x128xf32>
    %16 = arith.negf %15 : vector<8x128xf32>
    %17 = math.exp %16 : vector<8x128xf32>
    %cst = arith.constant 1.000000e+00 : f32
    %18 = vector.broadcast %cst : f32 to vector<8x128xf32>
    %19 = arith.addf %18, %17 : vector<8x128xf32>
    %20 = arith.divf %18, %19 : vector<8x128xf32>
    %21 = math.tanh %15 : vector<8x128xf32>
    %22 = vector.extract_strided_slice %20 {offsets = [3, 0], sizes = [1, 128], strides = [1, 1]} : vector<8x128xf32> to vector<1x128xf32>
    %23 = vector.extract_strided_slice %20 {offsets = [0, 0], sizes = [1, 128], strides = [1, 1]} : vector<8x128xf32> to vector<1x128xf32>
    %24 = vector.extract_strided_slice %21 {offsets = [2, 0], sizes = [1, 128], strides = [1, 1]} : vector<8x128xf32> to vector<1x128xf32>
    %25 = arith.mulf %23, %24 : vector<1x128xf32>
    %26 = math.tanh %25 : vector<1x128xf32>
    %27 = arith.mulf %22, %26 : vector<1x128xf32>
    %28 = vector.extract_strided_slice %20 {offsets = [7, 0], sizes = [1, 128], strides = [1, 1]} : vector<8x128xf32> to vector<1x128xf32>
    %29 = vector.extract_strided_slice %20 {offsets = [4, 0], sizes = [1, 128], strides = [1, 1]} : vector<8x128xf32> to vector<1x128xf32>
    %30 = vector.extract_strided_slice %21 {offsets = [6, 0], sizes = [1, 128], strides = [1, 1]} : vector<8x128xf32> to vector<1x128xf32>
    %31 = arith.mulf %29, %30 : vector<1x128xf32>
    %32 = math.tanh %31 : vector<1x128xf32>
    %33 = arith.mulf %28, %32 : vector<1x128xf32>
    %34 = vector.extract_strided_slice %0 {offsets = [2, 0], sizes = [1, 128], strides = [1, 1]} : vector<4x128xf32> to vector<1x128xf32>
    %cst_5 = arith.constant 0.000000e+00 : f32
    %35 = vector.broadcast %cst_5 : f32 to vector<1x128xf32>
    %36 = arith.cmpf olt, %34, %35 : vector<1x128xf32>
    %37 = math.ceil %34 : vector<1x128xf32>
    %38 = math.floor %34 : vector<1x128xf32>
    %39 = arith.select %36, %37, %38 : vector<1x128xi1>, vector<1x128xf32>
    %cst_6 = arith.constant 0.000000e+00 : f32
    %cst_7 = arith.constant 1.000000e+00 : f32
    %40 = vector.broadcast %cst_6 : f32 to vector<1x128xf32>
    %41 = arith.maximumf %40, %39 : vector<1x128xf32>
    %42 = vector.broadcast %cst_7 : f32 to vector<1x128xf32>
    %43 = arith.minimumf %42, %41 : vector<1x128xf32>
    %c0_8 = arith.constant 0 : index
    %c0_9 = arith.constant 0 : index
    %44 = vector.load %arg3[%c0_8, %c0_9] : memref<20x1xf32, #tpu.memory_space<vmem>>, vector<20x1xf32>
    %c0_10 = arith.constant 0 : index
    %c0_11 = arith.constant 0 : index
    %45 = vector.load %arg4[%c0_10, %c0_11] : memref<20x1xf32, #tpu.memory_space<vmem>>, vector<20x1xf32>
    %46 = vector.broadcast %43 : vector<1x128xf32> to vector<20x128xf32>
    %47 = vector.broadcast %45 : vector<20x1xf32> to vector<20x128xf32>
    %48 = arith.mulf %46, %47 : vector<20x128xf32>
    %49 = vector.broadcast %44 : vector<20x1xf32> to vector<20x128xf32>
    %50 = arith.addf %49, %48 : vector<20x128xf32>
    %51 = vector.extract_strided_slice %0 {offsets = [3, 0], sizes = [1, 128], strides = [1, 1]} : vector<4x128xf32> to vector<1x128xf32>
    %52 = arith.fptosi %51 : vector<1x128xf32> to vector<1x128xi32>
    %53 = tpu.iota {dimensions = array<i32: 0>} : vector<128x128xi32>
    %54 = vector.broadcast %52 : vector<1x128xi32> to vector<128x128xi32>
    %55 = arith.cmpi eq, %53, %54 : vector<128x128xi32>
    %56 = arith.extui %55 : vector<128x128xi1> to vector<128x128xi32>
    %57 = arith.sitofp %56 : vector<128x128xi32> to vector<128x128xf32>
    %c0_12 = arith.constant 0 : index
    %c0_13 = arith.constant 0 : index
    %58 = vector.load %arg2[%c0_12, %c0_13] : memref<20x128xf32, #tpu.memory_space<vmem>>, vector<20x128xf32>
    %cst_14 = arith.constant dense<0.000000e+00> : vector<20x128xf32>
    %59 = tpu.matmul %58, %57, %cst_14 {dimension_numbers = #tpu.dot_dimension_numbers<[1], [0], [0], [1], [0, 0, 1, 1], [], []>} : vector<20x128xf32>, vector<128x128xf32>, vector<20x128xf32> -> vector<20x128xf32>
    %c0_15 = arith.constant 0 : index
    %c0_16 = arith.constant 0 : index
    %60 = vector.load %arg7[%c0_15, %c0_16] : memref<20x2xf32, #tpu.memory_space<vmem>>, vector<20x2xf32>
    %61 = arith.addf %59, %50 : vector<20x128xf32>
    %62 = vector.extract_strided_slice %60 {offsets = [0, 0], sizes = [20, 1], strides = [1, 1]} : vector<20x2xf32> to vector<20x1xf32>
    %63 = vector.broadcast %27 : vector<1x128xf32> to vector<20x128xf32>
    %64 = vector.broadcast %62 : vector<20x1xf32> to vector<20x128xf32>
    %65 = arith.mulf %63, %64 : vector<20x128xf32>
    %66 = arith.addf %61, %65 : vector<20x128xf32>
    %67 = vector.extract_strided_slice %60 {offsets = [0, 1], sizes = [20, 1], strides = [1, 1]} : vector<20x2xf32> to vector<20x1xf32>
    %68 = vector.broadcast %33 : vector<1x128xf32> to vector<20x128xf32>
    %69 = vector.broadcast %67 : vector<20x1xf32> to vector<20x128xf32>
    %70 = arith.mulf %68, %69 : vector<20x128xf32>
    %71 = arith.addf %66, %70 : vector<20x128xf32>
    %c0_17 = arith.constant 0 : index
    %c0_18 = arith.constant 0 : index
    %72 = vector.load %arg8[%c0_17, %c0_18] : memref<20x1xf32, #tpu.memory_space<vmem>>, vector<20x1xf32>
    %73 = vector.broadcast %72 : vector<20x1xf32> to vector<20x128xf32>
    %74 = arith.addf %71, %73 : vector<20x128xf32>
    %75 = math.tanh %74 : vector<20x128xf32>
    %c0_19 = arith.constant 0 : index
    %c0_20 = arith.constant 0 : index
    %76 = vector.load %arg9[%c0_19, %c0_20] : memref<20x1xf32, #tpu.memory_space<vmem>>, vector<20x1xf32>
    %77 = vector.broadcast %76 : vector<20x1xf32> to vector<20x128xf32>
    %78 = arith.mulf %75, %77 : vector<20x128xf32>
    %cst_21 = arith.constant dense<0.000000e+00> : vector<128xf32>
    %79 = vector.multi_reduction <add>, %78, %cst_21 [0] : vector<20x128xf32> to vector<128xf32>
    %80 = vector.shape_cast %79 : vector<128xf32> to vector<1x128xf32>
    %c0_22 = arith.constant 0 : index
    %c0_23 = arith.constant 0 : index
    %81 = vector.load %arg10[%c0_22, %c0_23] : memref<1x1xf32, #tpu.memory_space<vmem>>, vector<1x1xf32>
    %82 = vector.broadcast %81 : vector<1x1xf32> to vector<1x128xf32>
    %83 = arith.addf %80, %82 : vector<1x128xf32>
    %c0_24 = arith.constant 0 : index
    %c0_25 = arith.constant 0 : index
    %84 = vector.load %arg11[%c0_24, %c0_25] : memref<1x128xf32, #tpu.memory_space<vmem>>, vector<1x128xf32>
    tpu.vector_store %arg11[%c0_24, %c0_25], %83 {strides = array<i32>} : memref<1x128xf32, #tpu.memory_space<vmem>>, vector<1x128xf32>,
    return
  }
  func.func @transform_0(%arg0: i32) -> (i32, i32) {
    %c0_i32 = arith.constant 0 : i32
    %c0_i32_0 = arith.constant 0 : i32
    return %c0_i32, %arg0 : i32, i32
  }
  func.func @transform_1(%arg0: i32) -> (i32, i32) {
    %c0_i32 = arith.constant 0 : i32
    %c0_i32_0 = arith.constant 0 : i32
    %c0_i32_1 = arith.constant 0 : i32
    return %c0_i32, %c0_i32_0 : i32, i32
  }
  func.func @transform_2(%arg0: i32) -> (i32, i32) {
    %c0_i32 = arith.constant 0 : i32
    %c0_i32_0 = arith.constant 0 : i32
    %c0_i32_1 = arith.constant 0 : i32
    return %c0_i32, %c0_i32_0 : i32, i32
  }
  func.func @transform_3(%arg0: i32) -> (i32, i32) {
    %c0_i32 = arith.constant 0 : i32
    %c0_i32_0 = arith.constant 0 : i32
    %c0_i32_1 = arith.constant 0 : i32
    return %c0_i32, %c0_i32_0 : i32, i32
  }
  func.func @transform_4(%arg0: i32) -> (i32, i32) {
    %c0_i32 = arith.constant 0 : i32
    %c0_i32_0 = arith.constant 0 : i32
    %c0_i32_1 = arith.constant 0 : i32
    return %c0_i32, %c0_i32_0 : i32, i32
  }
  func.func @transform_5(%arg0: i32) -> (i32, i32) {
    %c0_i32 = arith.constant 0 : i32
    %c0_i32_0 = arith.constant 0 : i32
    %c0_i32_1 = arith.constant 0 : i32
    return %c0_i32, %c0_i32_0 : i32, i32
  }
  func.func @transform_6(%arg0: i32) -> (i32, i32) {
    %c0_i32 = arith.constant 0 : i32
    %c0_i32_0 = arith.constant 0 : i32
    %c0_i32_1 = arith.constant 0 : i32
    return %c0_i32, %c0_i32_0 : i32, i32
  }
  func.func @transform_7(%arg0: i32) -> (i32, i32) {
    %c0_i32 = arith.constant 0 : i32
    %c0_i32_0 = arith.constant 0 : i32
    %c0_i32_1 = arith.constant 0 : i32
    return %c0_i32, %c0_i32_0 : i32, i32
  }
  func.func @transform_8(%arg0: i32) -> (i32, i32) {
    %c0_i32 = arith.constant 0 : i32
    %c0_i32_0 = arith.constant 0 : i32
    %c0_i32_1 = arith.constant 0 : i32
    return %c0_i32, %c0_i32_0 : i32, i32
  }
  func.func @transform_9(%arg0: i32) -> (i32, i32) {
    %c0_i32 = arith.constant 0 : i32
    %c0_i32_0 = arith.constant 0 : i32
    %c0_i32_1 = arith.constant 0 : i32
    return %c0_i32, %c0_i32_0 : i32, i32
  }
  func.func @transform_10(%arg0: i32) -> (i32, i32) {
    %c0_i32 = arith.constant 0 : i32
    %c0_i32_0 = arith.constant 0 : i32
    return %c0_i32, %arg0 : i32, i32
  }
}

</mosaic_0001>

<llo_original>
// kernel: tpu_custom_call.1
$region0: #{tpu_custom_call.1}
  #allocation0 [shape = 'u32[]', space=smem, size = 0x4, offset = 0x4, fixed_abs, tag = 'smem constant byte address 0x4 - core index']
  #allocation1 [shape = 'u32[144,128]{1,0:T(1,128)}', space=vmem, size = 0x12000, scoped, tag = 'internal scratch']
  #allocation2 [shape = 'f32[1,1]{1,0:T(1,128)S(1)}', space=vmem, size = 0x200, scoped, tag = 'scoped memory for tpu_custom_call.1']
  %s0 = inlined_call_operand.vmem [shape: f32[4,128], index: 0, kind: input, shape index: {}]
  %s1 = inlined_call_operand.vmem [shape: f32[20,128], index: 1, kind: input, shape index: {}]
  %s2 = inlined_call_operand.vmem [shape: f32[20,1], index: 2, kind: input, shape index: {}]
  %s3 = inlined_call_operand.vmem [shape: f32[20,1], index: 3, kind: input, shape index: {}]
  %s4 = inlined_call_operand.vmem [shape: f32[8,2], index: 4, kind: input, shape index: {}]
  %s5 = inlined_call_operand.vmem [shape: f32[8,1], index: 5, kind: input, shape index: {}]
  %s6 = inlined_call_operand.vmem [shape: f32[20,2], index: 6, kind: input, shape index: {}]
  %s7 = inlined_call_operand.vmem [shape: f32[20,1], index: 7, kind: input, shape index: {}]
  %s8 = inlined_call_operand.vmem [shape: f32[20,1], index: 8, kind: input, shape index: {}]
  %s9 = inlined_call_operand.<no memory space> [shape: f32[1,1], index: 9, kind: input, shape index: {}]
  %s10 = inlined_call_operand.hbm [shape: f32[1,128], index: 10, kind: output, shape index: {}]
  %s11 = sld [smem:[#allocation0]]
  $region50: #{tpu_custom_call.1} parent=0
    _
  %s13 = ssub.s32 1, %s11
  %s14 = scalar_select 0, %s13, %s11
  %v15 = vstv %s9
  %16 = vst [vmem:[#allocation2] sm:$0x1] %v15
  $region1: #{tpu_custom_call.1} parent=0
    #allocation3 [shape = 'u8[512]{0}', space=vmem, size = 0x400, scoped, tag = 'output window, operand 0, single buffered']
    #allocation4 [shape = 's32[1]{0}', space=sflag, size = 0x4, scoped, tag = 'scoped memory for tpu_custom_call.1']
    %17 = vsyncpa [#allocation4], 0
    // Predicated region
    $region2: #{tpu_custom_call.1} parent=1 // pred_check
      _
    $region3: #{tpu_custom_call.1} parent=1 // pred_check_branch
      %19 = sbr.rel (0) target = $region5
    $region4: #{tpu_custom_call.1} parent=1 // pred_region
      _
    $region5: #{tpu_custom_call.1} parent=1 // pred_fallthru
      _
    // Predicated region
    $region6: #{tpu_custom_call.1} parent=1 // pred_check
      _
    $region7: #{tpu_custom_call.1} parent=1 // pred_check_branch
      %21 = sbr.rel (0) target = $region9
    $region8: #{tpu_custom_call.1} parent=1 // pred_region
      _
    $region9: #{tpu_custom_call.1} parent=1 // pred_fallthru
      _
    // Predicated region
    $region10: #{tpu_custom_call.1} parent=1 // pred_check
      _
    $region11: #{tpu_custom_call.1} parent=1 // pred_check_branch
      %23 = sbr.rel (0) target = $region13
    $region12: #{tpu_custom_call.1} parent=1 // pred_region
      _
    $region13: #{tpu_custom_call.1} parent=1 // pred_fallthru
      _
    // Predicated region
    $region14: #{tpu_custom_call.1} parent=1 // pred_check
      _
    $region15: #{tpu_custom_call.1} parent=1 // pred_check_branch
      %25 = sbr.rel (0) target = $region17
    $region16: #{tpu_custom_call.1} parent=1 // pred_region
      _
    $region17: #{tpu_custom_call.1} parent=1 // pred_fallthru
      _
    // Predicated region
    $region18: #{tpu_custom_call.1} parent=1 // pred_check
      _
    $region19: #{tpu_custom_call.1} parent=1 // pred_check_branch
      %27 = sbr.rel (0) target = $region21
    $region20: #{tpu_custom_call.1} parent=1 // pred_region
      _
    $region21: #{tpu_custom_call.1} parent=1 // pred_fallthru
      _
    // Predicated region
    $region22: #{tpu_custom_call.1} parent=1 // pred_check
      _
    $region23: #{tpu_custom_call.1} parent=1 // pred_check_branch
      %29 = sbr.rel (0) target = $region25
    $region24: #{tpu_custom_call.1} parent=1 // pred_region
      _
    $region25: #{tpu_custom_call.1} parent=1 // pred_fallthru
      _
    // Predicated region
    $region26: #{tpu_custom_call.1} parent=1 // pred_check
      _
    $region27: #{tpu_custom_call.1} parent=1 // pred_check_branch
      %31 = sbr.rel (0) target = $region29
    $region28: #{tpu_custom_call.1} parent=1 // pred_region
      _
    $region29: #{tpu_custom_call.1} parent=1 // pred_fallthru
      _
    // Predicated region
    $region30: #{tpu_custom_call.1} parent=1 // pred_check
      _
    $region31: #{tpu_custom_call.1} parent=1 // pred_check_branch
      %33 = sbr.rel (0) target = $region33
    $region32: #{tpu_custom_call.1} parent=1 // pred_region
      _
    $region33: #{tpu_custom_call.1} parent=1 // pred_fallthru
      _
    // Predicated region
    $region34: #{tpu_custom_call.1} parent=1 // pred_check
      _
    $region35: #{tpu_custom_call.1} parent=1 // pred_check_branch
      %35 = sbr.rel (0) target = $region37
    $region36: #{tpu_custom_call.1} parent=1 // pred_region
      _
    $region37: #{tpu_custom_call.1} parent=1 // pred_fallthru
      _
    // Predicated region
    $region38: #{tpu_custom_call.1} parent=1 // pred_check
      _
    $region39: #{tpu_custom_call.1} parent=1 // pred_check_branch
      %37 = sbr.rel (0) target = $region41
    $region40: #{tpu_custom_call.1} parent=1 // pred_region
      _
    $region41: #{tpu_custom_call.1} parent=1 // pred_fallthru
      _
    %v38 = vld [vmem:[%s0] sm:$0xf]
    %v39 = vld [vmem:[%s4] sm:$0xff]
    %41 = vset.pattern.permute.xlu0 0
    %42 = vperm.xlu0 %41, %v39
    %v43 = vpop.permute.xlu0 %42
    %v45 = vlaneseq
    %v46 = vshrl.u32 %v45, 7
    %v47 = vsub.s32 0, %v46
    %v48 = vrot.slane %v38, %v47
    %v49 = vmul.f32 %v43, %v48
    %50 = vset.pattern.permute.xlu0 1
    %51 = vperm.xlu0 %50, %v39
    %v52 = vpop.permute.xlu0 %51
    %v54 = vlaneseq
    %v55 = vshrl.u32 %v54, 7
    %v56 = vsub.s32 1, %v55
    %v57 = vrot.slane %v38, %v56
    %v58 = vmul.f32 %v52, %v57
    %v59 = vadd.f32 %v49, %v58
    %v60 = vld [vmem:[%s5] sm:$0xff]
    %62 = vset.pattern.permute.xlu0 0
    %63 = vperm.xlu0 %62, %v60
    %v64 = vpop.permute.xlu0 %63
    %v66 = vadd.f32 %v59, %v64
    %v67 = vxor.u32 %v66, 2147483648
    %v68 = vmul.f32 %v67, 1.442695
    %v69 = vpow.pop %v68
    %v70 = vadd.f32 %v69, 1.0
    %v71 = vrcp.pop %v70
    %v72 = vmul.f32 1.0, %v71
    %v73 = vtanh.pop %v66
    %v75 = vrot.slane %v73, 2
    %v77 = vmul.f32 %v72, %v75
    %v78 = vtanh.pop %v77
    %v80 = vrot.slane %v78, 5
    %v82 = vmul.f32 %v72, %v80
    %vm83 = vcmp.lt.f32.partialorder %v38, 0.0
    %v84 = vceil.f32 %v38
    %v85 = vfloor.f32 %v38
    %v86 = vsel %vm83, %v84, %v85
    %v87 = vmax.f32 %v86, 0.0
    %v88 = vmin.f32 %v87, 1.0
    %v89 = vld [vmem:[%s2] sm:$0xff]
    %v90 = vld [vmem:[%s2 + $0x8] sm:$0xff]
    %v91 = vld [vmem:[%s2 + $0x10] sm:$0xf]
    %v92 = vld [vmem:[%s3] sm:$0xff]
    %v93 = vld [vmem:[%s3 + $0x8] sm:$0xff]
    %v94 = vld [vmem:[%s3 + $0x10] sm:$0xf]
    %v95 = vlaneseq
    %v96 = vshrl.u32 %v95, 7
    %v97 = vsub.s32 2, %v96
    %v98 = vrot.slane %v88, %v97
    %100 = vset.pattern.permute.xlu0 0
    %101 = vperm.xlu0 %100, %v92
    %v102 = vpop.permute.xlu0 %101
    %105 = vset.pattern.permute.xlu0 0
    %106 = vperm.xlu0 %105, %v93
    %v107 = vpop.permute.xlu0 %106
    %110 = vset.pattern.permute.xlu0 0
    %111 = vperm.xlu0 %110, %v94
    %v112 = vpop.permute.xlu0 %111
    %v114 = vmul.f32 %v98, %v102
    %v115 = vmul.f32 %v98, %v107
    %v116 = vmul.f32 %v98, %v112
    %118 = vset.pattern.permute.xlu0 0
    %119 = vperm.xlu0 %118, %v89
    %v120 = vpop.permute.xlu0 %119
    %123 = vset.pattern.permute.xlu0 0
    %124 = vperm.xlu0 %123, %v90
    %v125 = vpop.permute.xlu0 %124
    %128 = vset.pattern.permute.xlu0 0
    %129 = vperm.xlu0 %128, %v91
    %v130 = vpop.permute.xlu0 %129
    %v132 = vadd.f32 %v120, %v114
    %v133 = vadd.f32 %v125, %v115
    %v134 = vadd.f32 %v130, %v116
    %v135 = vcvt.f32.s32.to.zero.pseudo %v38
    %v136 = vlaneseq
    %v137 = vshrl.u32 %v136, 7
    %v138 = vadd.s32 %v137, 8
    %v139 = vadd.s32 %v137, 16
    %v140 = vadd.s32 %v137, 24
    %v141 = vadd.s32 %v137, 32
    %v142 = vadd.s32 %v137, 40
    %v143 = vadd.s32 %v137, 48
    %v144 = vadd.s32 %v137, 56
    %v145 = vadd.s32 %v137, 64
    %v146 = vadd.s32 %v137, 72
    %v147 = vadd.s32 %v137, 80
    %v148 = vadd.s32 %v137, 88
    %v149 = vadd.s32 %v137, 96
    %v150 = vadd.s32 %v137, 104
    %v151 = vadd.s32 %v137, 112
    %v152 = vadd.s32 %v137, 120
    %v153 = vlaneseq
    %v154 = vshrl.u32 %v153, 7
    %v155 = vsub.s32 3, %v154
    %v156 = vrot.slane %v135, %v155
    %vm157 = vcmp.eq.s32.totalorder %v137, %v156
    %vm158 = vcmp.eq.s32.totalorder %v138, %v156
    %vm159 = vcmp.eq.s32.totalorder %v139, %v156
    %vm160 = vcmp.eq.s32.totalorder %v140, %v156
    %vm161 = vcmp.eq.s32.totalorder %v141, %v156
    %vm162 = vcmp.eq.s32.totalorder %v142, %v156
    %vm163 = vcmp.eq.s32.totalorder %v143, %v156
    %vm164 = vcmp.eq.s32.totalorder %v144, %v156
    %vm165 = vcmp.eq.s32.totalorder %v145, %v156
    %vm166 = vcmp.eq.s32.totalorder %v146, %v156
    %vm167 = vcmp.eq.s32.totalorder %v147, %v156
    %vm168 = vcmp.eq.s32.totalorder %v148, %v156
    %vm169 = vcmp.eq.s32.totalorder %v149, %v156
    %vm170 = vcmp.eq.s32.totalorder %v150, %v156
    %vm171 = vcmp.eq.s32.totalorder %v151, %v156
    %vm172 = vcmp.eq.s32.totalorder %v152, %v156
    %v173 = vsel %vm157, 1, 0
    %v174 = vsel %vm158, 1, 0
    %v175 = vsel %vm159, 1, 0
    %v176 = vsel %vm160, 1, 0
    %v177 = vsel %vm161, 1, 0
    %v178 = vsel %vm162, 1, 0
    %v179 = vsel %vm163, 1, 0
    %v180 = vsel %vm164, 1, 0
    %v181 = vsel %vm165, 1, 0
    %v182 = vsel %vm166, 1, 0
    %v183 = vsel %vm167, 1, 0
    %v184 = vsel %vm168, 1, 0
    %v185 = vsel %vm169, 1, 0
    %v186 = vsel %vm170, 1, 0
    %v187 = vsel %vm171, 1, 0
    %v188 = vsel %vm172, 1, 0
    %v189 = vcvt.s32.f32 %v173
    %v190 = vcvt.s32.f32 %v174
    %v191 = vcvt.s32.f32 %v175
    %v192 = vcvt.s32.f32 %v176
    %v193 = vcvt.s32.f32 %v177
    %v194 = vcvt.s32.f32 %v178
    %v195 = vcvt.s32.f32 %v179
    %v196 = vcvt.s32.f32 %v180
    %v197 = vcvt.s32.f32 %v181
    %v198 = vcvt.s32.f32 %v182
    %v199 = vcvt.s32.f32 %v183
    %v200 = vcvt.s32.f32 %v184
    %v201 = vcvt.s32.f32 %v185
    %v202 = vcvt.s32.f32 %v186
    %v203 = vcvt.s32.f32 %v187
    %v204 = vcvt.s32.f32 %v188
    %v205 = vld [vmem:[%s1] sm:$0xff]
    %v206 = vld [vmem:[%s1 + $0x8] sm:$0xff]
    %v207 = vld [vmem:[%s1 + $0x10] sm:$0xf]
    %v208 = vld [vmem:[%s6] sm:$0xff]
    %v209 = vld [vmem:[%s6 + $0x8] sm:$0xff]
    %v210 = vld [vmem:[%s6 + $0x10] sm:$0xf]
    %211 = vmatprep.subr.mxu0 0.0
    %212 = vmatpush1.msra.mxu0 %v189
    %213 = vmatprep.subr.mxu0 0.0
    %214 = vmatpush1.msra.mxu0 %v190
    %215 = vmatprep.subr.mxu0 0.0
    %216 = vmatpush1.msra.mxu0 %v191
    %217 = vmatprep.subr.mxu0 0.0
    %218 = vmatpush1.msra.mxu0 %v192
    %219 = vmatprep.subr.mxu0 0.0
    %220 = vmatpush1.msra.mxu0 %v193
    %221 = vmatprep.subr.mxu0 0.0
    %222 = vmatpush1.msra.mxu0 %v194
    %223 = vmatprep.subr.mxu0 0.0
    %224 = vmatpush1.msra.mxu0 %v195
    %225 = vmatprep.subr.mxu0 0.0
    %226 = vmatpush1.msra.mxu0 %v196
    %227 = vmatprep.subr.mxu0 0.0
    %228 = vmatpush1.msra.mxu0 %v197
    %229 = vmatprep.subr.mxu0 0.0
    %230 = vmatpush1.msra.mxu0 %v198
    %231 = vmatprep.subr.mxu0 0.0
    %232 = vmatpush1.msra.mxu0 %v199
    %233 = vmatprep.subr.mxu0 0.0
    %234 = vmatpush1.msra.mxu0 %v200
    %235 = vmatprep.subr.mxu0 0.0
    %236 = vmatpush1.msra.mxu0 %v201
    %237 = vmatprep.subr.mxu0 0.0
    %238 = vmatpush1.msra.mxu0 %v202
    %239 = vmatprep.subr.mxu0 0.0
    %240 = vmatpush1.msra.mxu0 %v203
    %241 = vmatprep.subr.mxu0 0.0
    %242 = vmatpush1.msra.mxu0 %v204
    %243 = vmatprep.subr.mxu0 0.0
    %244 = vmatpush1.msra.mxu0 0.0
    %245 = vmatprep.subr.mxu0 0.0
    %246 = vmatpush1.msra.mxu0 0.0
    %247 = vmatprep.subr.mxu0 0.0
    %248 = vmatpush1.msra.mxu0 0.0
    %249 = vmatprep.subr.mxu0 0.0
    %250 = vmatpush1.msra.mxu0 0.0
    %251 = vmatprep.subr.mxu0 0.0
    %252 = vmatpush1.msra.mxu0 0.0
    %253 = vmatprep.subr.mxu0 0.0
    %254 = vmatpush1.msra.mxu0 0.0
    %255 = vmatprep.subr.mxu0 0.0
    %256 = vmatpush1.msra.mxu0 0.0
    %257 = vmatprep.subr.mxu0 0.0
    %258 = vmatpush1.msra.mxu0 0.0
    %259 = vmatprep.subr.mxu0 0.0
    %260 = vmatpush1.msra.mxu0 0.0
    %261 = vmatprep.subr.mxu0 0.0
    %262 = vmatpush1.msra.mxu0 0.0
    %263 = vmatprep.subr.mxu0 0.0
    %264 = vmatpush1.msra.mxu0 0.0
    %265 = vmatprep.subr.mxu0 0.0
    %266 = vmatpush1.msra.mxu0 0.0
    %267 = vmatprep.subr.mxu0 0.0
    %268 = vmatpush1.msra.mxu0 0.0
    %269 = vmatprep.subr.mxu0 0.0
    %270 = vmatpush1.msra.mxu0 0.0
    %271 = vmatprep.subr.mxu0 0.0
    %272 = vmatpush1.msra.mxu0 0.0
    %273 = vmatprep.subr.mxu0 0.0
    %274 = vmatpush1.msra.mxu0 0.0
    %275 = vmatprep.mubr.f32.mxu0 0.0
    %276 = vmatmul.mubr.f32.gmra.mrb[0].mxu0 %v205
    %v277 = vpop.f32.mrb[0].mxu0
    %v278 = vadd.f32 %v132, %v277
    %v279 = vpop.f32.mrb[0].mxu0
    %280 = vmatprep.mubr.f32.mxu0 0.0
    %281 = vmatmul.mubr.f32.gmra.mrb[0].mxu0 %v206
    %v282 = vpop.f32.mrb[0].mxu0
    %v283 = vadd.f32 %v133, %v282
    %v284 = vpop.f32.mrb[0].mxu0
    %285 = vmatprep.mubr.f32.mxu0 0.0
    %286 = vmatmul.mubr.f32.gmra.mrb[0].mxu0 %v207
    %v287 = vpop.f32.mrb[0].mxu0
    %v288 = vadd.f32 %v134, %v287
    %v289 = vpop.f32.mrb[0].mxu0
    %290 = vdwg.mxu0
    %v291 = vlaneseq
    %v292 = vshrl.u32 %v291, 7
    %v293 = vsub.s32 3, %v292
    %v294 = vrot.slane %v82, %v293
    %296 = vset.pattern.permute.xlu0 0
    %297 = vperm.xlu0 %296, %v208
    %v298 = vpop.permute.xlu0 %297
    %301 = vset.pattern.permute.xlu0 0
    %302 = vperm.xlu0 %301, %v209
    %v303 = vpop.permute.xlu0 %302
    %306 = vset.pattern.permute.xlu0 0
    %307 = vperm.xlu0 %306, %v210
    %v308 = vpop.permute.xlu0 %307
    %v310 = vmul.f32 %v294, %v298
    %v311 = vmul.f32 %v294, %v303
    %v312 = vmul.f32 %v294, %v308
    %v313 = vadd.f32 %v278, %v310
    %v314 = vadd.f32 %v283, %v311
    %v315 = vadd.f32 %v288, %v312
    %v316 = vlaneseq
    %v317 = vshrl.u32 %v316, 7
    %v318 = vsub.s32 7, %v317
    %v319 = vrot.slane %v82, %v318
    %320 = vset.pattern.permute.xlu0 1
    %321 = vperm.xlu0 %320, %v208
    %v322 = vpop.permute.xlu0 %321
    %324 = vset.pattern.permute.xlu0 1
    %325 = vperm.xlu0 %324, %v209
    %v326 = vpop.permute.xlu0 %325
    %328 = vset.pattern.permute.xlu0 1
    %329 = vperm.xlu0 %328, %v210
    %v330 = vpop.permute.xlu0 %329
    %v332 = vmul.f32 %v319, %v322
    %v333 = vmul.f32 %v319, %v326
    %v334 = vmul.f32 %v319, %v330
    %v335 = vadd.f32 %v313, %v332
    %v336 = vadd.f32 %v314, %v333
    %v337 = vadd.f32 %v315, %v334
    %v338 = vld [vmem:[%s7] sm:$0xff]
    %v339 = vld [vmem:[%s7 + $0x8] sm:$0xff]
    %v340 = vld [vmem:[%s7 + $0x10] sm:$0xf]
    %342 = vset.pattern.permute.xlu0 0
    %343 = vperm.xlu0 %342, %v338
    %v344 = vpop.permute.xlu0 %343
    %347 = vset.pattern.permute.xlu0 0
    %348 = vperm.xlu0 %347, %v339
    %v349 = vpop.permute.xlu0 %348
    %352 = vset.pattern.permute.xlu0 0
    %353 = vperm.xlu0 %352, %v340
    %v354 = vpop.permute.xlu0 %353
    %v356 = vadd.f32 %v335, %v344
    %v357 = vadd.f32 %v336, %v349
    %v358 = vadd.f32 %v337, %v354
    %v359 = vtanh.pop %v356
    %v360 = vtanh.pop %v357
    %v361 = vtanh.pop %v358
    %v362 = vld [vmem:[%s8] sm:$0xff]
    %v363 = vld [vmem:[%s8 + $0x8] sm:$0xff]
    %v364 = vld [vmem:[%s8 + $0x10] sm:$0xf]
    %366 = vset.pattern.permute.xlu0 0
    %367 = vperm.xlu0 %366, %v362
    %v368 = vpop.permute.xlu0 %367
    %371 = vset.pattern.permute.xlu0 0
    %372 = vperm.xlu0 %371, %v363
    %v373 = vpop.permute.xlu0 %372
    %376 = vset.pattern.permute.xlu0 0
    %377 = vperm.xlu0 %376, %v364
    %v378 = vpop.permute.xlu0 %377
    %v380 = vmul.f32 %v359, %v368
    %v381 = vmul.f32 %v360, %v373
    %v382 = vmul.f32 %v361, %v378
    %v383 = vadd.f32 %v380, %v381
    %vm384 = vcmask 1043456
    %v385 = vsel %vm384, %v382, 0.0
    %v386 = vadd.f32 %v383, %v385
    %v387 = vrot.slane %v386, 4
    %v388 = vadd.f32 %v386, %v387
    %v389 = vrot.slane %v388, 2
    %v390 = vadd.f32 %v388, %v389
    %v391 = vrot.slane %v390, 1
    %v392 = vadd.f32 %v390, %v391
    %v393 = vld [vmem:[#allocation2] sm:$0x1]
    %395 = vset.pattern.permute.xlu0 0
    %396 = vperm.xlu0 %395, %v393
    %v397 = vpop.permute.xlu0 %396
    %v399 = vlaneseq
    %v400 = vshrl.u32 %v399, 7
    %v401 = vsub.s32 0, %v400
    %v402 = vrot.slane %v397, %v401
    %v403 = vadd.f32 %v392, %v402
    %404 = vst [vmem:[#allocation3] sm:$0x1] %v403
    // Predicated region
    $region42: #{tpu_custom_call.1} parent=1 // pred_check
      _
    $region43: #{tpu_custom_call.1} parent=1 // pred_check_branch
      %406 = sbr.rel (0) target = $region45
    $region44: #{tpu_custom_call.1} parent=1 // pred_region
      %s408 = ssub.s32 16, 16
      %409 = vsyncadd [#allocation4], %s408
      %s411 = sshll.u32 [#allocation3], 4
      %s412 = int_to_ptr.vmem [resolvable:$true] %s411
      %414 = dma.vmem_to_hbm [thread:$0]  %s412, 16, %s10, [#allocation4]
    $region45: #{tpu_custom_call.1} parent=1 // pred_fallthru
      _
    // Predicated region
    $region46: #{tpu_custom_call.1} parent=1 // pred_check
      _
    $region47: #{tpu_custom_call.1} parent=1 // pred_check_branch
      %416 = sbr.rel (0) target = $region49
    $region48: #{tpu_custom_call.1} parent=1 // pred_region
      %417 = dma.done [#allocation4], 16
    $region49: #{tpu_custom_call.1} parent=1 // pred_fallthru
      _
    %418 = vsyncpa [#allocation4], 1

</llo_original>
